<compile_context>
chip_gen: v7x
topology: tpu7x:2x2x1
jax: 0.10.0
libtpu: 0.0.40
codegen_flags: <defaults>
</compile_context>

<pallas_src>
import jax
import jax.numpy as jnp
from jax.experimental import pallas as pl
from jax.experimental.pallas import tpu as pltpu

LANES = 128  # uniform padded feature width (vreg lane width)
VMEM_SPEC = pl.BlockSpec(memory_space=pltpu.MemorySpace.VMEM)

LAYER_DIMS = [(2, 32), (32, 64), (64, 128)]
BN_EPS = 1e-5


# ---------------------------------------------------------------------------
# Fused kernel: 3x (SAGE + BN + ReLU)  ->  mean-pool  ->  fc1+ReLU  ->  fc2
# ---------------------------------------------------------------------------
def fused_graphsage_kernel(a_ref, p_ref, x_ref, w_ref, b_ref, out_ref):
    a = a_ref[...]            # (N, N)   bf16 row-normalized adjacency (mean aggr)
    h = x_ref[...]            # (N, 128) bf16 padded node features
    b = b_ref[...]            # (8, 128) f32  packed bias rows (BN-folded)

    # w_ref: (8, 128, 128) bf16 = [Wl1, Wr1, Wl2, Wr2, Wl3, Wr3, fc1_w, fc2_w]
    for li in range(3):
        neigh = jnp.dot(a, h, preferred_element_type=jnp.float32)        # (N,128) f32
        z = (jnp.dot(neigh.astype(jnp.bfloat16), w_ref[2 * li],
                     preferred_element_type=jnp.float32)
             + jnp.dot(h, w_ref[2 * li + 1],
                       preferred_element_type=jnp.float32)
             + b[li:li + 1, :])                                          # BN folded in
        h = jnp.maximum(z, 0.0).astype(jnp.bfloat16)                     # fused ReLU

    pooled = jnp.dot(p_ref[...], h, preferred_element_type=jnp.float32)  # (G,128) f32
    h1 = jnp.maximum(
        jnp.dot(pooled.astype(jnp.bfloat16), w_ref[6],
                preferred_element_type=jnp.float32)
        + b[3:4, :],
        0.0)
    # TODO(synk): Dropout(0.5) is identity in eval mode; omitted.
    out_ref[...] = (jnp.dot(h1.astype(jnp.bfloat16), w_ref[7],
                            preferred_element_type=jnp.float32)
                    + b[4:5, :])                                          # (G,128) f32


def graphsage_forward(w_all, b_all, x_pad, a_norm, pool_mat):
    g = pool_mat.shape[0]
    out_pad = pl.pallas_call(
        fused_graphsage_kernel,
        out_shape=jax.ShapeDtypeStruct((g, LANES), jnp.float32),
        in_specs=[VMEM_SPEC] * 5,
        out_specs=VMEM_SPEC,
    )(a_norm, pool_mat, x_pad, w_all, b_all)
    return out_pad[:, :1]     # slice lane-dense (G,128) -> (G,1)


# ---------------------------------------------------------------------------
# Raw (PyTorch-like) parameters, BN fold, 128-lane padding, operand packing.
# ---------------------------------------------------------------------------
def init_raw_params(key):
    params = {}
    keys = jax.random.split(key, 32)
    ki = 0

    def nxt():
        nonlocal ki
        k = keys[ki]
        ki += 1
        return k

    for li, (din, dout) in enumerate(LAYER_DIMS, start=1):
        s = 1.0 / jnp.sqrt(jnp.float32(din))
        params[f"wl{li}"] = jax.random.uniform(nxt(), (din, dout), jnp.float32, -s, s)
        params[f"wr{li}"] = jax.random.uniform(nxt(), (din, dout), jnp.float32, -s, s)
        params[f"b{li}"] = jax.random.uniform(nxt(), (dout,), jnp.float32, -s, s)
        params[f"bn{li}_gamma"] = 1.0 + 0.1 * jax.random.normal(nxt(), (dout,), jnp.float32)
        params[f"bn{li}_beta"] = 0.1 * jax.random.normal(nxt(), (dout,), jnp.float32)
        params[f"bn{li}_mean"] = 0.1 * jax.random.normal(nxt(), (dout,), jnp.float32)
        params[f"bn{li}_var"] = 1.0 + 0.1 * jax.random.uniform(nxt(), (dout,), jnp.float32)

    s = 1.0 / jnp.sqrt(jnp.float32(128))
    params["fc1_w"] = jax.random.uniform(nxt(), (128, 64), jnp.float32, -s, s)
    params["fc1_b"] = jax.random.uniform(nxt(), (64,), jnp.float32, -s, s)
    s = 1.0 / jnp.sqrt(jnp.float32(64))
    params["fc2_w"] = jax.random.uniform(nxt(), (64, 1), jnp.float32, -s, s)
    params["fc2_b"] = jax.random.uniform(nxt(), (1,), jnp.float32, -s, s)
    return params


def fold_and_pad_params(raw):
    """Fold BN into the SAGE weights, pad to 128x128 lane-dense tiles, and
    coalesce into one stacked weight tensor (bf16) + one bias tensor (f32)."""
    w_list, b_rows = [], []
    for li, (din, dout) in enumerate(LAYER_DIMS, start=1):
        scale = raw[f"bn{li}_gamma"] / jnp.sqrt(raw[f"bn{li}_var"] + BN_EPS)   # (dout,)
        shift = raw[f"bn{li}_beta"] - raw[f"bn{li}_mean"] * scale
        wl = jnp.zeros((LANES, LANES), jnp.float32).at[:din, :dout].set(
            raw[f"wl{li}"] * scale[None, :])
        wr = jnp.zeros((LANES, LANES), jnp.float32).at[:din, :dout].set(
            raw[f"wr{li}"] * scale[None, :])
        w_list += [wl, wr]
        b_rows.append(jnp.zeros((LANES,), jnp.float32).at[:dout].set(
            raw[f"b{li}"] * scale + shift))

    w_list.append(jnp.zeros((LANES, LANES), jnp.float32).at[:, :64].set(raw["fc1_w"]))
    w_list.append(jnp.zeros((LANES, LANES), jnp.float32).at[:64, :1].set(raw["fc2_w"]))
    b_rows.append(jnp.zeros((LANES,), jnp.float32).at[:64].set(raw["fc1_b"]))
    b_rows.append(jnp.zeros((LANES,), jnp.float32).at[:1].set(raw["fc2_b"]))
    b_rows += [jnp.zeros((LANES,), jnp.float32)] * 3          # pad to 8 sublanes

    w_all = jnp.stack(w_list).astype(jnp.bfloat16)            # (8, 128, 128) bf16
    b_all = jnp.stack(b_rows)                                  # (8, 128)      f32
    return w_all, b_all


def build_structure(edge_index, batch, num_nodes, num_graphs):
    """Dense row-normalized adjacency (mean aggregation) and mean-pool matrix."""
    src, dst = edge_index[0], edge_index[1]
    adj = jnp.zeros((num_nodes, num_nodes), jnp.float32).at[dst, src].add(1.0)
    deg = jnp.maximum(adj.sum(axis=1, keepdims=True), 1.0)
    a_norm = adj / deg                                      # mean over in-neighbors
    onehot = (batch[None, :] == jnp.arange(num_graphs)[:, None]).astype(jnp.float32)
    counts = jnp.maximum(onehot.sum(axis=1, keepdims=True), 1.0)
    pool_mat = onehot / counts                              # per-graph mean pool
    return a_norm, pool_mat


# Pure-JAX f32 reference (un-folded, un-padded parameters) for correctness.
def graphsage_reference(raw, x, a_norm, pool_mat):
    h = x
    for li in range(1, 4):
        neigh = a_norm @ h
        z = neigh @ raw[f"wl{li}"] + h @ raw[f"wr{li}"] + raw[f"b{li}"]
        scale = raw[f"bn{li}_gamma"] / jnp.sqrt(raw[f"bn{li}_var"] + BN_EPS)
        z = (z - raw[f"bn{li}_mean"]) * scale + raw[f"bn{li}_beta"]
        h = jnp.maximum(z, 0.0)
    pooled = pool_mat @ h
    h1 = jnp.maximum(pooled @ raw["fc1_w"] + raw["fc1_b"], 0.0)
    return h1 @ raw["fc2_w"] + raw["fc2_b"]


if __name__ == "__main__":
    key = jax.random.PRNGKey(0)
    k_param, k_x, k_edge = jax.random.split(key, 3)

    num_nodes, num_graphs, in_dim, num_edges = 16, 2, 2, 48

    # Node features (N, F); first 8 nodes -> graph 0, rest -> graph 1.
    x = jax.random.normal(k_x, (num_nodes, in_dim), jnp.float32)
    batch = jnp.concatenate([jnp.zeros(8, jnp.int32), jnp.ones(8, jnp.int32)])

    # Random intra-graph edges (src -> dst), COO edge_index of shape (2, E).
    ke1, ke2 = jax.random.split(k_edge)
    src_local = jax.random.randint(ke1, (num_edges,), 0, 8)
    dst_local = jax.random.randint(ke2, (num_edges,), 0, 8)
    graph_of_edge = jnp.concatenate(
        [jnp.zeros(num_edges // 2, jnp.int32), jnp.ones(num_edges // 2, jnp.int32)])
    edge_index = jnp.stack([src_local + 8 * graph_of_edge,
                            dst_local + 8 * graph_of_edge])

    a_norm_f32, pool_mat_f32 = build_structure(edge_index, batch, num_nodes, num_graphs)
    raw_params = init_raw_params(k_param)
    w_all, b_all = fold_and_pad_params(raw_params)

    # Pad node features to the uniform 128-lane width; bf16 matmul operands.
    x_pad = (jnp.zeros((num_nodes, LANES), jnp.float32)
             .at[:, :in_dim].set(x).astype(jnp.bfloat16))
    a_norm = a_norm_f32.astype(jnp.bfloat16)
    pool_mat = pool_mat_f32.astype(jnp.bfloat16)

    out = graphsage_forward(w_all, b_all, x_pad, a_norm, pool_mat)
    out = jax.block_until_ready(out)

    ref = graphsage_reference(raw_params, x, a_norm_f32, pool_mat_f32)
    assert out.shape == (num_graphs, 1)
    # bf16 inputs / f32 accumulation -> ~1e-2-level agreement vs the f32 reference.
    assert bool(jnp.allclose(out, ref, atol=5e-2, rtol=5e-2)), "mismatch vs reference"

    print("KERNEL_OK")
</pallas_src>

<mosaic_0001>
module attributes {stable_mosaic.version = 11 : i64} {
  func.func @fused_graphsage_kernel(%arg0: memref<16x16xbf16, #tpu.memory_space<vmem>>, %arg1: memref<2x16xbf16, #tpu.memory_space<vmem>>, %arg2: memref<16x128xbf16, #tpu.memory_space<vmem>>, %arg3: memref<8x128x128xbf16, #tpu.memory_space<vmem>>, %arg4: memref<8x128xf32, #tpu.memory_space<vmem>>, %arg5: memref<2x128xf32, #tpu.memory_space<vmem>>) attributes {dimension_semantics = [], scalar_prefetch = 0 : i64, scratch_operands = 0 : i64, tpu.core_type = #tpu.core_type<tc>} {
    %c0 = arith.constant 0 : index
    %c0_0 = arith.constant 0 : index
    %0 = vector.load %arg0[%c0, %c0_0] : memref<16x16xbf16, #tpu.memory_space<vmem>>, vector<16x16xbf16>
    %c0_1 = arith.constant 0 : index
    %c0_2 = arith.constant 0 : index
    %1 = vector.load %arg2[%c0_1, %c0_2] : memref<16x128xbf16, #tpu.memory_space<vmem>>, vector<16x128xbf16>
    %c0_3 = arith.constant 0 : index
    %c0_4 = arith.constant 0 : index
    %2 = vector.load %arg4[%c0_3, %c0_4] : memref<8x128xf32, #tpu.memory_space<vmem>>, vector<8x128xf32>
    %cst = arith.constant dense<0.000000e+00> : vector<16x128xf32>
    %3 = tpu.matmul %0, %1, %cst {dimension_numbers = #tpu.dot_dimension_numbers<[1], [0], [0], [1], [0, 0, 1, 1], [], []>} : vector<16x16xbf16>, vector<16x128xbf16>, vector<16x128xf32> -> vector<16x128xf32>
    %4 = arith.truncf %3 : vector<16x128xf32> to vector<16x128xbf16>
    %c0_5 = arith.constant 0 : index
    %c0_6 = arith.constant 0 : index
    %c0_7 = arith.constant 0 : index
    %5 = vector.load %arg3[%c0_5, %c0_6, %c0_7] : memref<8x128x128xbf16, #tpu.memory_space<vmem>>, vector<1x128x128xbf16>
    %6 = vector.shape_cast %5 : vector<1x128x128xbf16> to vector<128x128xbf16>
    %cst_8 = arith.constant dense<0.000000e+00> : vector<16x128xf32>
    %7 = tpu.matmul %4, %6, %cst_8 {dimension_numbers = #tpu.dot_dimension_numbers<[1], [0], [0], [1], [0, 0, 1, 1], [], []>} : vector<16x128xbf16>, vector<128x128xbf16>, vector<16x128xf32> -> vector<16x128xf32>
    %c1 = arith.constant 1 : index
    %c0_9 = arith.constant 0 : index
    %c0_10 = arith.constant 0 : index
    %8 = vector.load %arg3[%c1, %c0_9, %c0_10] : memref<8x128x128xbf16, #tpu.memory_space<vmem>>, vector<1x128x128xbf16>
    %9 = vector.shape_cast %8 : vector<1x128x128xbf16> to vector<128x128xbf16>
    %cst_11 = arith.constant dense<0.000000e+00> : vector<16x128xf32>
    %10 = tpu.matmul %1, %9, %cst_11 {dimension_numbers = #tpu.dot_dimension_numbers<[1], [0], [0], [1], [0, 0, 1, 1], [], []>} : vector<16x128xbf16>, vector<128x128xbf16>, vector<16x128xf32> -> vector<16x128xf32>
    %11 = arith.addf %7, %10 : vector<16x128xf32>
    %12 = vector.extract_strided_slice %2 {offsets = [0, 0], sizes = [1, 128], strides = [1, 1]} : vector<8x128xf32> to vector<1x128xf32>
    %13 = vector.broadcast %12 : vector<1x128xf32> to vector<16x128xf32>
    %14 = arith.addf %11, %13 : vector<16x128xf32>
    %cst_12 = arith.constant 0.000000e+00 : f32
    %15 = vector.broadcast %cst_12 : f32 to vector<16x128xf32>
    %16 = arith.maximumf %14, %15 : vector<16x128xf32>
    %17 = arith.truncf %16 : vector<16x128xf32> to vector<16x128xbf16>
    %cst_13 = arith.constant dense<0.000000e+00> : vector<16x128xf32>
    %18 = tpu.matmul %0, %17, %cst_13 {dimension_numbers = #tpu.dot_dimension_numbers<[1], [0], [0], [1], [0, 0, 1, 1], [], []>} : vector<16x16xbf16>, vector<16x128xbf16>, vector<16x128xf32> -> vector<16x128xf32>
    %19 = arith.truncf %18 : vector<16x128xf32> to vector<16x128xbf16>
    %c2 = arith.constant 2 : index
    %c0_14 = arith.constant 0 : index
    %c0_15 = arith.constant 0 : index
    %20 = vector.load %arg3[%c2, %c0_14, %c0_15] : memref<8x128x128xbf16, #tpu.memory_space<vmem>>, vector<1x128x128xbf16>
    %21 = vector.shape_cast %20 : vector<1x128x128xbf16> to vector<128x128xbf16>
    %cst_16 = arith.constant dense<0.000000e+00> : vector<16x128xf32>
    %22 = tpu.matmul %19, %21, %cst_16 {dimension_numbers = #tpu.dot_dimension_numbers<[1], [0], [0], [1], [0, 0, 1, 1], [], []>} : vector<16x128xbf16>, vector<128x128xbf16>, vector<16x128xf32> -> vector<16x128xf32>
    %c3 = arith.constant 3 : index
    %c0_17 = arith.constant 0 : index
    %c0_18 = arith.constant 0 : index
    %23 = vector.load %arg3[%c3, %c0_17, %c0_18] : memref<8x128x128xbf16, #tpu.memory_space<vmem>>, vector<1x128x128xbf16>
    %24 = vector.shape_cast %23 : vector<1x128x128xbf16> to vector<128x128xbf16>
    %cst_19 = arith.constant dense<0.000000e+00> : vector<16x128xf32>
    %25 = tpu.matmul %17, %24, %cst_19 {dimension_numbers = #tpu.dot_dimension_numbers<[1], [0], [0], [1], [0, 0, 1, 1], [], []>} : vector<16x128xbf16>, vector<128x128xbf16>, vector<16x128xf32> -> vector<16x128xf32>
    %26 = arith.addf %22, %25 : vector<16x128xf32>
    %27 = vector.extract_strided_slice %2 {offsets = [1, 0], sizes = [1, 128], strides = [1, 1]} : vector<8x128xf32> to vector<1x128xf32>
    %28 = vector.broadcast %27 : vector<1x128xf32> to vector<16x128xf32>
    %29 = arith.addf %26, %28 : vector<16x128xf32>
    %cst_20 = arith.constant 0.000000e+00 : f32
    %30 = vector.broadcast %cst_20 : f32 to vector<16x128xf32>
    %31 = arith.maximumf %29, %30 : vector<16x128xf32>
    %32 = arith.truncf %31 : vector<16x128xf32> to vector<16x128xbf16>
    %cst_21 = arith.constant dense<0.000000e+00> : vector<16x128xf32>
    %33 = tpu.matmul %0, %32, %cst_21 {dimension_numbers = #tpu.dot_dimension_numbers<[1], [0], [0], [1], [0, 0, 1, 1], [], []>} : vector<16x16xbf16>, vector<16x128xbf16>, vector<16x128xf32> -> vector<16x128xf32>
    %34 = arith.truncf %33 : vector<16x128xf32> to vector<16x128xbf16>
    %c4 = arith.constant 4 : index
    %c0_22 = arith.constant 0 : index
    %c0_23 = arith.constant 0 : index
    %35 = vector.load %arg3[%c4, %c0_22, %c0_23] : memref<8x128x128xbf16, #tpu.memory_space<vmem>>, vector<1x128x128xbf16>
    %36 = vector.shape_cast %35 : vector<1x128x128xbf16> to vector<128x128xbf16>
    %cst_24 = arith.constant dense<0.000000e+00> : vector<16x128xf32>
    %37 = tpu.matmul %34, %36, %cst_24 {dimension_numbers = #tpu.dot_dimension_numbers<[1], [0], [0], [1], [0, 0, 1, 1], [], []>} : vector<16x128xbf16>, vector<128x128xbf16>, vector<16x128xf32> -> vector<16x128xf32>
    %c5 = arith.constant 5 : index
    %c0_25 = arith.constant 0 : index
    %c0_26 = arith.constant 0 : index
    %38 = vector.load %arg3[%c5, %c0_25, %c0_26] : memref<8x128x128xbf16, #tpu.memory_space<vmem>>, vector<1x128x128xbf16>
    %39 = vector.shape_cast %38 : vector<1x128x128xbf16> to vector<128x128xbf16>
    %cst_27 = arith.constant dense<0.000000e+00> : vector<16x128xf32>
    %40 = tpu.matmul %32, %39, %cst_27 {dimension_numbers = #tpu.dot_dimension_numbers<[1], [0], [0], [1], [0, 0, 1, 1], [], []>} : vector<16x128xbf16>, vector<128x128xbf16>, vector<16x128xf32> -> vector<16x128xf32>
    %41 = arith.addf %37, %40 : vector<16x128xf32>
    %42 = vector.extract_strided_slice %2 {offsets = [2, 0], sizes = [1, 128], strides = [1, 1]} : vector<8x128xf32> to vector<1x128xf32>
    %43 = vector.broadcast %42 : vector<1x128xf32> to vector<16x128xf32>
    %44 = arith.addf %41, %43 : vector<16x128xf32>
    %cst_28 = arith.constant 0.000000e+00 : f32
    %45 = vector.broadcast %cst_28 : f32 to vector<16x128xf32>
    %46 = arith.maximumf %44, %45 : vector<16x128xf32>
    %47 = arith.truncf %46 : vector<16x128xf32> to vector<16x128xbf16>
    %c0_29 = arith.constant 0 : index
    %c0_30 = arith.constant 0 : index
    %48 = vector.load %arg1[%c0_29, %c0_30] : memref<2x16xbf16, #tpu.memory_space<vmem>>, vector<2x16xbf16>
    %cst_31 = arith.constant dense<0.000000e+00> : vector<2x128xf32>
    %49 = tpu.matmul %48, %47, %cst_31 {dimension_numbers = #tpu.dot_dimension_numbers<[1], [0], [0], [1], [0, 0, 1, 1], [], []>} : vector<2x16xbf16>, vector<16x128xbf16>, vector<2x128xf32> -> vector<2x128xf32>
    %50 = arith.truncf %49 : vector<2x128xf32> to vector<2x128xbf16>
    %c6 = arith.constant 6 : index
    %c0_32 = arith.constant 0 : index
    %c0_33 = arith.constant 0 : index
    %51 = vector.load %arg3[%c6, %c0_32, %c0_33] : memref<8x128x128xbf16, #tpu.memory_space<vmem>>, vector<1x128x128xbf16>
    %52 = vector.shape_cast %51 : vector<1x128x128xbf16> to vector<128x128xbf16>
    %cst_34 = arith.constant dense<0.000000e+00> : vector<2x128xf32>
    %53 = tpu.matmul %50, %52, %cst_34 {dimension_numbers = #tpu.dot_dimension_numbers<[1], [0], [0], [1], [0, 0, 1, 1], [], []>} : vector<2x128xbf16>, vector<128x128xbf16>, vector<2x128xf32> -> vector<2x128xf32>
    %54 = vector.extract_strided_slice %2 {offsets = [3, 0], sizes = [1, 128], strides = [1, 1]} : vector<8x128xf32> to vector<1x128xf32>
    %55 = vector.broadcast %54 : vector<1x128xf32> to vector<2x128xf32>
    %56 = arith.addf %53, %55 : vector<2x128xf32>
    %cst_35 = arith.constant 0.000000e+00 : f32
    %57 = vector.broadcast %cst_35 : f32 to vector<2x128xf32>
    %58 = arith.maximumf %56, %57 : vector<2x128xf32>
    %59 = arith.truncf %58 : vector<2x128xf32> to vector<2x128xbf16>
    %c7 = arith.constant 7 : index
    %c0_36 = arith.constant 0 : index
    %c0_37 = arith.constant 0 : index
    %60 = vector.load %arg3[%c7, %c0_36, %c0_37] : memref<8x128x128xbf16, #tpu.memory_space<vmem>>, vector<1x128x128xbf16>
    %61 = vector.shape_cast %60 : vector<1x128x128xbf16> to vector<128x128xbf16>
    %cst_38 = arith.constant dense<0.000000e+00> : vector<2x128xf32>
    %62 = tpu.matmul %59, %61, %cst_38 {dimension_numbers = #tpu.dot_dimension_numbers<[1], [0], [0], [1], [0, 0, 1, 1], [], []>} : vector<2x128xbf16>, vector<128x128xbf16>, vector<2x128xf32> -> vector<2x128xf32>
    %63 = vector.extract_strided_slice %2 {offsets = [4, 0], sizes = [1, 128], strides = [1, 1]} : vector<8x128xf32> to vector<1x128xf32>
    %64 = vector.broadcast %63 : vector<1x128xf32> to vector<2x128xf32>
    %65 = arith.addf %62, %64 : vector<2x128xf32>
    %c0_39 = arith.constant 0 : index
    %c0_40 = arith.constant 0 : index
    %66 = vector.load %arg5[%c0_39, %c0_40] : memref<2x128xf32, #tpu.memory_space<vmem>>, vector<2x128xf32>
    tpu.vector_store %arg5[%c0_39, %c0_40], %65 {strides = array<i32>} : memref<2x128xf32, #tpu.memory_space<vmem>>, vector<2x128xf32>,
    return
  }
}

</mosaic_0001>

<llo_original>
// kernel: tpu_custom_call.1
$region0: #{tpu_custom_call.1}
  #allocation0 [shape = 'u32[]', space=smem, size = 0x4, offset = 0x4, fixed_abs, tag = 'smem constant byte address 0x4 - core index']
  #allocation1 [shape = 'u32[144,128]{1,0:T(1,128)}', space=vmem, size = 0x12000, scoped, tag = 'internal scratch']
  %s0 = inlined_call_operand.hbm [shape: bf16[16,16], index: 0, kind: input, shape index: {}]
  %s1 = inlined_call_operand.vmem [shape: bf16[2,16], index: 1, kind: input, shape index: {}]
  %s2 = inlined_call_operand.hbm [shape: bf16[16,128], index: 2, kind: input, shape index: {}]
  %s3 = inlined_call_operand.hbm [shape: bf16[8,128,128], index: 3, kind: input, shape index: {}]
  %s4 = inlined_call_operand.vmem [shape: f32[8,128], index: 4, kind: input, shape index: {}]
  %s5 = inlined_call_operand.hbm [shape: f32[2,128], index: 5, kind: output, shape index: {}]
  %s6 = sld [smem:[#allocation0]]
  $region42: #{tpu_custom_call.1} parent=0
    _
  %s8 = ssub.s32 1, %s6
  %s9 = scalar_select 0, %s8, %s6
  $region1: #{tpu_custom_call.1} parent=0
    #allocation2 [shape = 'u8[4096]{0}', space=vmem, size = 0x1000, scoped, tag = 'input window, operand 0, single buffered']
    #allocation3 [shape = 's32[1]{0}', space=sflag, size = 0x4, scoped, tag = 'scoped memory for tpu_custom_call.1']
    #allocation4 [shape = 's32[1]{0}', space=sflag, size = 0x4, scoped, tag = 'scoped memory for tpu_custom_call.1']
    #allocation5 [shape = 'u8[4096]{0}', space=vmem, size = 0x1000, scoped, tag = 'input window, operand 2, single buffered']
    #allocation6 [shape = 's32[1]{0}', space=sflag, size = 0x4, scoped, tag = 'scoped memory for tpu_custom_call.1']
    #allocation7 [shape = 'u8[262144]{0}', space=vmem, size = 0x40000, scoped, tag = 'input window, operand 3, single buffered']
    #allocation8 [shape = 'u8[1024]{0}', space=vmem, size = 0x400, scoped, tag = 'output window, operand 0, single buffered']
    %10 = vsyncpa [#allocation3], 0
    %11 = vsyncpa [#allocation6], 0
    %12 = vsyncpa [#allocation4], 0
    // Predicated region
    $region2: #{tpu_custom_call.1} parent=1 // pred_check
      _
    $region3: #{tpu_custom_call.1} parent=1 // pred_check_branch
      %14 = sbr.rel (0) target = $region5
    $region4: #{tpu_custom_call.1} parent=1 // pred_region
      %s16 = ssub.s32 128, 128
      %17 = vsyncadd [#allocation3], %s16
      %s18 = sshll.u32 [#allocation2], 4
      %s19 = int_to_ptr.vmem [resolvable:$true] %s18
      %24 = dma.hbm_to_vmem [thread:$0]  %s0, 128, %s19, [#allocation3], 64, 64, 4
    $region5: #{tpu_custom_call.1} parent=1 // pred_fallthru
      _
    // Predicated region
    $region6: #{tpu_custom_call.1} parent=1 // pred_check
      _
    $region7: #{tpu_custom_call.1} parent=1 // pred_check_branch
      %26 = sbr.rel (0) target = $region9
    $region8: #{tpu_custom_call.1} parent=1 // pred_region
      _
    $region9: #{tpu_custom_call.1} parent=1 // pred_fallthru
      _
    // Predicated region
    $region10: #{tpu_custom_call.1} parent=1 // pred_check
      _
    $region11: #{tpu_custom_call.1} parent=1 // pred_check_branch
      %28 = sbr.rel (0) target = $region13
    $region12: #{tpu_custom_call.1} parent=1 // pred_region
      %s30 = ssub.s32 128, 128
      %31 = vsyncadd [#allocation6], %s30
      %s32 = sshll.u32 [#allocation5], 4
      %s33 = int_to_ptr.vmem [resolvable:$true] %s32
      %38 = dma.hbm_to_vmem [thread:$0]  %s2, 128, %s33, [#allocation6], 64, 64, 4
    $region13: #{tpu_custom_call.1} parent=1 // pred_fallthru
      _
    // Predicated region
    $region14: #{tpu_custom_call.1} parent=1 // pred_check
      _
    $region15: #{tpu_custom_call.1} parent=1 // pred_check_branch
      %40 = sbr.rel (0) target = $region17
    $region16: #{tpu_custom_call.1} parent=1 // pred_region
      %s42 = ssub.s32 8192, 8192
      %43 = vsyncadd [#allocation6], %s42
      %s44 = sshll.u32 [#allocation7], 4
      %s45 = int_to_ptr.vmem [resolvable:$true] %s44
      %50 = dma.hbm_to_vmem [thread:$0]  %s3, 8192, %s45, [#allocation6], 64, 64, 4
    $region17: #{tpu_custom_call.1} parent=1 // pred_fallthru
      _
    // Predicated region
    $region18: #{tpu_custom_call.1} parent=1 // pred_check
      _
    $region19: #{tpu_custom_call.1} parent=1 // pred_check_branch
      %52 = sbr.rel (0) target = $region21
    $region20: #{tpu_custom_call.1} parent=1 // pred_region
      _
    $region21: #{tpu_custom_call.1} parent=1 // pred_fallthru
      _
    // Predicated region
    $region22: #{tpu_custom_call.1} parent=1 // pred_check
      _
    $region23: #{tpu_custom_call.1} parent=1 // pred_check_branch
      %54 = sbr.rel (0) target = $region25
    $region24: #{tpu_custom_call.1} parent=1 // pred_region
      %55 = dma.done [#allocation3], 128
    $region25: #{tpu_custom_call.1} parent=1 // pred_fallthru
      _
    // Predicated region
    $region26: #{tpu_custom_call.1} parent=1 // pred_check
      _
    $region27: #{tpu_custom_call.1} parent=1 // pred_check_branch
      %57 = sbr.rel (0) target = $region29
    $region28: #{tpu_custom_call.1} parent=1 // pred_region
      %58 = dma.done [#allocation6], 128
    $region29: #{tpu_custom_call.1} parent=1 // pred_fallthru
      _
    // Predicated region
    $region30: #{tpu_custom_call.1} parent=1 // pred_check
      _
    $region31: #{tpu_custom_call.1} parent=1 // pred_check_branch
      %60 = sbr.rel (0) target = $region33
    $region32: #{tpu_custom_call.1} parent=1 // pred_region
      %61 = dma.done [#allocation6], 8192
    $region33: #{tpu_custom_call.1} parent=1 // pred_fallthru
      _
    %v63 = vld [vmem:[#allocation2] sm:$0xf]
    %v64 = vld [vmem:[#allocation2 + $0x4] sm:$0xf]
    %v65 = vld [vmem:[#allocation5] sm:$0xf]
    %v66 = vld [vmem:[#allocation5 + $0x4] sm:$0xf]
    %v67 = vld [vmem:[%s4] sm:$0xff]
    %v70 = vunpack.c.l.b16 %v63
    %v71 = vunpack.c.l.b16 %v64
    %v72 = vpack.c.b16 %v71, %v70
    %v75 = vunpack.c.l.b16 %v65
    %v76 = vunpack.c.l.b16 %v66
    %v77 = vpack.c.b16 %v76, %v75
    %vm79 = vcmask 130048
    %v81 = vsel %vm79, %v72, 0
    %83 = vmatprep.subr.bf16.mxu0 0
    %84 = vmatpush1.bf16.msra.mxu0 %v77
    %85 = vmatprep.subr.bf16.mxu0 0
    %86 = vmatpush1.bf16.msra.mxu0 0
    %87 = vmatprep.subr.bf16.mxu0 0
    %88 = vmatpush1.bf16.msra.mxu0 0
    %89 = vmatprep.subr.bf16.mxu0 0
    %90 = vmatpush1.bf16.msra.mxu0 0
    %91 = vmatprep.subr.bf16.mxu0 0
    %92 = vmatpush1.bf16.msra.mxu0 0
    %93 = vmatprep.subr.bf16.mxu0 0
    %94 = vmatpush1.bf16.msra.mxu0 0
    %95 = vmatprep.subr.bf16.mxu0 0
    %96 = vmatpush1.bf16.msra.mxu0 0
    %97 = vmatprep.subr.bf16.mxu0 0
    %98 = vmatpush1.bf16.msra.mxu0 0
    %99 = vmatprep.subr.bf16.mxu0 0
    %100 = vmatpush1.bf16.msra.mxu0 0
    %101 = vmatprep.subr.bf16.mxu0 0
    %102 = vmatpush1.bf16.msra.mxu0 0
    %103 = vmatprep.subr.bf16.mxu0 0
    %104 = vmatpush1.bf16.msra.mxu0 0
    %105 = vmatprep.subr.bf16.mxu0 0
    %106 = vmatpush1.bf16.msra.mxu0 0
    %107 = vmatprep.subr.bf16.mxu0 0
    %108 = vmatpush1.bf16.msra.mxu0 0
    %109 = vmatprep.subr.bf16.mxu0 0
    %110 = vmatpush1.bf16.msra.mxu0 0
    %111 = vmatprep.subr.bf16.mxu0 0
    %112 = vmatpush1.bf16.msra.mxu0 0
    %113 = vmatprep.subr.bf16.mxu0 0
    %114 = vmatpush1.bf16.msra.mxu0 0
    %115 = vmatprep.mubr.bf16.mxu0 0
    %116 = vmatmul.mubr.bf16.gmra.mrb[0].mxu0 %v81
    %v117 = vpop.f32.mrb[0].mxu0
    %v118 = vadd.f32 0.0, %v117
    %v119 = vpop.f32.mrb[0].mxu0
    %v120 = vpop.f32.mrb[0].mxu0
    %v121 = vadd.f32 0.0, %v120
    %v122 = vpop.f32.mrb[0].mxu0
    %123 = vdwg.mxu0
    %v124 = vpack.c.bf16 %v121, %v118
    %v125 = vld [vmem:[#allocation7] sm:$0xf]
    %v126 = vld [vmem:[#allocation7 + $0x4] sm:$0xf]
    %v127 = vld [vmem:[#allocation7 + $0x8] sm:$0xf]
    %v128 = vld [vmem:[#allocation7 + $0xc] sm:$0xf]
    %v129 = vld [vmem:[#allocation7 + $0x10] sm:$0xf]
    %v130 = vld [vmem:[#allocation7 + $0x14] sm:$0xf]
    %v131 = vld [vmem:[#allocation7 + $0x18] sm:$0xf]
    %v132 = vld [vmem:[#allocation7 + $0x1c] sm:$0xf]
    %v133 = vld [vmem:[#allocation7 + $0x20] sm:$0xf]
    %v134 = vld [vmem:[#allocation7 + $0x24] sm:$0xf]
    %v135 = vld [vmem:[#allocation7 + $0x28] sm:$0xf]
    %v136 = vld [vmem:[#allocation7 + $0x2c] sm:$0xf]
    %v137 = vld [vmem:[#allocation7 + $0x30] sm:$0xf]
    %v138 = vld [vmem:[#allocation7 + $0x34] sm:$0xf]
    %v139 = vld [vmem:[#allocation7 + $0x38] sm:$0xf]
    %v140 = vld [vmem:[#allocation7 + $0x3c] sm:$0xf]
    %s141 = scalar_lea.vmem [#allocation7], 64
    %v142 = vld [vmem:[%s141] sm:$0xf]
    %v143 = vld [vmem:[%s141 + $0x4] sm:$0xf]
    %v144 = vld [vmem:[%s141 + $0x8] sm:$0xf]
    %v145 = vld [vmem:[%s141 + $0xc] sm:$0xf]
    %v146 = vld [vmem:[%s141 + $0x10] sm:$0xf]
    %v147 = vld [vmem:[%s141 + $0x14] sm:$0xf]
    %v148 = vld [vmem:[%s141 + $0x18] sm:$0xf]
    %v149 = vld [vmem:[%s141 + $0x1c] sm:$0xf]
    %v150 = vld [vmem:[%s141 + $0x20] sm:$0xf]
    %v151 = vld [vmem:[%s141 + $0x24] sm:$0xf]
    %v152 = vld [vmem:[%s141 + $0x28] sm:$0xf]
    %v153 = vld [vmem:[%s141 + $0x2c] sm:$0xf]
    %v154 = vld [vmem:[%s141 + $0x30] sm:$0xf]
    %v155 = vld [vmem:[%s141 + $0x34] sm:$0xf]
    %v156 = vld [vmem:[%s141 + $0x38] sm:$0xf]
    %v157 = vld [vmem:[%s141 + $0x3c] sm:$0xf]
    %v174 = vunpack.c.l.b16 %v142
    %v175 = vunpack.c.l.b16 %v143
    %v176 = vunpack.c.l.b16 %v144
    %v177 = vunpack.c.l.b16 %v145
    %v178 = vunpack.c.l.b16 %v146
    %v179 = vunpack.c.l.b16 %v147
    %v180 = vunpack.c.l.b16 %v148
    %v181 = vunpack.c.l.b16 %v149
    %v182 = vunpack.c.l.b16 %v150
    %v183 = vunpack.c.l.b16 %v151
    %v184 = vunpack.c.l.b16 %v152
    %v185 = vunpack.c.l.b16 %v153
    %v186 = vunpack.c.l.b16 %v154
    %v187 = vunpack.c.l.b16 %v155
    %v188 = vunpack.c.l.b16 %v156
    %v189 = vunpack.c.l.b16 %v157
    %v190 = vpack.c.b16 %v175, %v174
    %v191 = vpack.c.b16 %v177, %v176
    %v192 = vpack.c.b16 %v179, %v178
    %v193 = vpack.c.b16 %v181, %v180
    %v194 = vpack.c.b16 %v183, %v182
    %v195 = vpack.c.b16 %v185, %v184
    %v196 = vpack.c.b16 %v187, %v186
    %v197 = vpack.c.b16 %v189, %v188
    %206 = vmatprep.subr.bf16.mxu0 0
    %207 = vmatpush1.bf16.msra.mxu0 %v190
    %208 = vmatprep.subr.bf16.mxu0 0
    %209 = vmatpush1.bf16.msra.mxu0 %v191
    %210 = vmatprep.subr.bf16.mxu0 0
    %211 = vmatpush1.bf16.msra.mxu0 %v192
    %212 = vmatprep.subr.bf16.mxu0 0
    %213 = vmatpush1.bf16.msra.mxu0 %v193
    %214 = vmatprep.subr.bf16.mxu0 0
    %215 = vmatpush1.bf16.msra.mxu0 %v194
    %216 = vmatprep.subr.bf16.mxu0 0
    %217 = vmatpush1.bf16.msra.mxu0 %v195
    %218 = vmatprep.subr.bf16.mxu0 0
    %219 = vmatpush1.bf16.msra.mxu0 %v196
    %220 = vmatprep.subr.bf16.mxu0 0
    %221 = vmatpush1.bf16.msra.mxu0 %v197
    %222 = vmatprep.subr.bf16.mxu0 0
    %223 = vmatpush1.bf16.msra.mxu0 0
    %224 = vmatprep.subr.bf16.mxu0 0
    %225 = vmatpush1.bf16.msra.mxu0 0
    %226 = vmatprep.subr.bf16.mxu0 0
    %227 = vmatpush1.bf16.msra.mxu0 0
    %228 = vmatprep.subr.bf16.mxu0 0
    %229 = vmatpush1.bf16.msra.mxu0 0
    %230 = vmatprep.subr.bf16.mxu0 0
    %231 = vmatpush1.bf16.msra.mxu0 0
    %232 = vmatprep.subr.bf16.mxu0 0
    %233 = vmatpush1.bf16.msra.mxu0 0
    %234 = vmatprep.subr.bf16.mxu0 0
    %235 = vmatpush1.bf16.msra.mxu0 0
    %236 = vmatprep.subr.bf16.mxu0 0
    %237 = vmatpush1.bf16.msra.mxu0 0
    %238 = vmatprep.mubr.bf16.mxu0 0
    %239 = vmatmul.mubr.bf16.gmra.mrb[0].mxu0 %v77
    %v240 = vpop.f32.mrb[0].mxu0
    %v241 = vadd.f32 0.0, %v240
    %v242 = vpop.f32.mrb[0].mxu0
    %v243 = vpop.f32.mrb[0].mxu0
    %v244 = vadd.f32 0.0, %v243
    %v245 = vpop.f32.mrb[0].mxu0
    %246 = vdwg.mxu0
    %v263 = vunpack.c.l.b16 %v125
    %v264 = vunpack.c.l.b16 %v126
    %v265 = vunpack.c.l.b16 %v127
    %v266 = vunpack.c.l.b16 %v128
    %v267 = vunpack.c.l.b16 %v129
    %v268 = vunpack.c.l.b16 %v130
    %v269 = vunpack.c.l.b16 %v131
    %v270 = vunpack.c.l.b16 %v132
    %v271 = vunpack.c.l.b16 %v133
    %v272 = vunpack.c.l.b16 %v134
    %v273 = vunpack.c.l.b16 %v135
    %v274 = vunpack.c.l.b16 %v136
    %v275 = vunpack.c.l.b16 %v137
    %v276 = vunpack.c.l.b16 %v138
    %v277 = vunpack.c.l.b16 %v139
    %v278 = vunpack.c.l.b16 %v140
    %v279 = vpack.c.b16 %v264, %v263
    %v280 = vpack.c.b16 %v266, %v265
    %v281 = vpack.c.b16 %v268, %v267
    %v282 = vpack.c.b16 %v270, %v269
    %v283 = vpack.c.b16 %v272, %v271
    %v284 = vpack.c.b16 %v274, %v273
    %v285 = vpack.c.b16 %v276, %v275
    %v286 = vpack.c.b16 %v278, %v277
    %295 = vmatprep.subr.bf16.mxu0 0
    %296 = vmatpush1.bf16.msra.mxu0 %v279
    %297 = vmatprep.subr.bf16.mxu0 0
    %298 = vmatpush1.bf16.msra.mxu0 %v280
    %299 = vmatprep.subr.bf16.mxu0 0
    %300 = vmatpush1.bf16.msra.mxu0 %v281
    %301 = vmatprep.subr.bf16.mxu0 0
    %302 = vmatpush1.bf16.msra.mxu0 %v282
    %303 = vmatprep.subr.bf16.mxu0 0
    %304 = vmatpush1.bf16.msra.mxu0 %v283
    %305 = vmatprep.subr.bf16.mxu0 0
    %306 = vmatpush1.bf16.msra.mxu0 %v284
    %307 = vmatprep.subr.bf16.mxu0 0
    %308 = vmatpush1.bf16.msra.mxu0 %v285
    %309 = vmatprep.subr.bf16.mxu0 0
    %310 = vmatpush1.bf16.msra.mxu0 %v286
    %311 = vmatprep.subr.bf16.mxu0 0
    %312 = vmatpush1.bf16.msra.mxu0 0
    %313 = vmatprep.subr.bf16.mxu0 0
    %314 = vmatpush1.bf16.msra.mxu0 0
    %315 = vmatprep.subr.bf16.mxu0 0
    %316 = vmatpush1.bf16.msra.mxu0 0
    %317 = vmatprep.subr.bf16.mxu0 0
    %318 = vmatpush1.bf16.msra.mxu0 0
    %319 = vmatprep.subr.bf16.mxu0 0
    %320 = vmatpush1.bf16.msra.mxu0 0
    %321 = vmatprep.subr.bf16.mxu0 0
    %322 = vmatpush1.bf16.msra.mxu0 0
    %323 = vmatprep.subr.bf16.mxu0 0
    %324 = vmatpush1.bf16.msra.mxu0 0
    %325 = vmatprep.subr.bf16.mxu0 0
    %326 = vmatpush1.bf16.msra.mxu0 0
    %327 = vmatprep.mubr.bf16.mxu0 0
    %328 = vmatmul.mubr.bf16.gmra.mrb[0].mxu0 %v124
    %v329 = vpop.f32.mrb[0].mxu0
    %v330 = vadd.f32 %v241, %v329
    %v331 = vpop.f32.mrb[0].mxu0
    %v332 = vpop.f32.mrb[0].mxu0
    %v333 = vadd.f32 %v244, %v332
    %v334 = vpop.f32.mrb[0].mxu0
    %335 = vdwg.mxu0
    %v336 = vlaneseq
    %v337 = vshrl.u32 %v336, 7
    %v338 = vsub.s32 0, %v337
    %v339 = vrot.slane %v67, %v338
    %v340 = vadd.f32 %v330, %v339
    %v341 = vadd.f32 %v333, %v339
    %v342 = vmax.f32 %v340, 0.0
    %v343 = vmax.f32 %v341, 0.0
    %v344 = vpack.c.bf16 %v343, %v342
    %345 = vmatprep.subr.bf16.mxu0 0
    %346 = vmatpush1.bf16.msra.mxu0 %v344
    %347 = vmatprep.subr.bf16.mxu0 0
    %348 = vmatpush1.bf16.msra.mxu0 0
    %349 = vmatprep.subr.bf16.mxu0 0
    %350 = vmatpush1.bf16.msra.mxu0 0
    %351 = vmatprep.subr.bf16.mxu0 0
    %352 = vmatpush1.bf16.msra.mxu0 0
    %353 = vmatprep.subr.bf16.mxu0 0
    %354 = vmatpush1.bf16.msra.mxu0 0
    %355 = vmatprep.subr.bf16.mxu0 0
    %356 = vmatpush1.bf16.msra.mxu0 0
    %357 = vmatprep.subr.bf16.mxu0 0
    %358 = vmatpush1.bf16.msra.mxu0 0
    %359 = vmatprep.subr.bf16.mxu0 0
    %360 = vmatpush1.bf16.msra.mxu0 0
    %361 = vmatprep.subr.bf16.mxu0 0
    %362 = vmatpush1.bf16.msra.mxu0 0
    %363 = vmatprep.subr.bf16.mxu0 0
    %364 = vmatpush1.bf16.msra.mxu0 0
    %365 = vmatprep.subr.bf16.mxu0 0
    %366 = vmatpush1.bf16.msra.mxu0 0
    %367 = vmatprep.subr.bf16.mxu0 0
    %368 = vmatpush1.bf16.msra.mxu0 0
    %369 = vmatprep.subr.bf16.mxu0 0
    %370 = vmatpush1.bf16.msra.mxu0 0
    %371 = vmatprep.subr.bf16.mxu0 0
    %372 = vmatpush1.bf16.msra.mxu0 0
    %373 = vmatprep.subr.bf16.mxu0 0
    %374 = vmatpush1.bf16.msra.mxu0 0
    %375 = vmatprep.subr.bf16.mxu0 0
    %376 = vmatpush1.bf16.msra.mxu0 0
    %377 = vmatprep.mubr.bf16.mxu0 0
    %378 = vmatmul.mubr.bf16.gmra.mrb[0].mxu0 %v81
    %v379 = vpop.f32.mrb[0].mxu0
    %v380 = vadd.f32 0.0, %v379
    %v381 = vpop.f32.mrb[0].mxu0
    %v382 = vpop.f32.mrb[0].mxu0
    %v383 = vadd.f32 0.0, %v382
    %v384 = vpop.f32.mrb[0].mxu0
    %385 = vdwg.mxu0
    %v386 = vpack.c.bf16 %v383, %v380
    %s387 = scalar_lea.vmem [#allocation7], 128
    %v388 = vld [vmem:[%s387] sm:$0xf]
    %v389 = vld [vmem:[%s387 + $0x4] sm:$0xf]
    %v390 = vld [vmem:[%s387 + $0x8] sm:$0xf]
    %v391 = vld [vmem:[%s387 + $0xc] sm:$0xf]
    %v392 = vld [vmem:[%s387 + $0x10] sm:$0xf]
    %v393 = vld [vmem:[%s387 + $0x14] sm:$0xf]
    %v394 = vld [vmem:[%s387 + $0x18] sm:$0xf]
    %v395 = vld [vmem:[%s387 + $0x1c] sm:$0xf]
    %v396 = vld [vmem:[%s387 + $0x20] sm:$0xf]
    %v397 = vld [vmem:[%s387 + $0x24] sm:$0xf]
    %v398 = vld [vmem:[%s387 + $0x28] sm:$0xf]
    %v399 = vld [vmem:[%s387 + $0x2c] sm:$0xf]
    %v400 = vld [vmem:[%s387 + $0x30] sm:$0xf]
    %v401 = vld [vmem:[%s387 + $0x34] sm:$0xf]
    %v402 = vld [vmem:[%s387 + $0x38] sm:$0xf]
    %v403 = vld [vmem:[%s387 + $0x3c] sm:$0xf]
    %s404 = scalar_lea.vmem [#allocation7], 192
    %v405 = vld [vmem:[%s404] sm:$0xf]
    %v406 = vld [vmem:[%s404 + $0x4] sm:$0xf]
    %v407 = vld [vmem:[%s404 + $0x8] sm:$0xf]
    %v408 = vld [vmem:[%s404 + $0xc] sm:$0xf]
    %v409 = vld [vmem:[%s404 + $0x10] sm:$0xf]
    %v410 = vld [vmem:[%s404 + $0x14] sm:$0xf]
    %v411 = vld [vmem:[%s404 + $0x18] sm:$0xf]
    %v412 = vld [vmem:[%s404 + $0x1c] sm:$0xf]
    %v413 = vld [vmem:[%s404 + $0x20] sm:$0xf]
    %v414 = vld [vmem:[%s404 + $0x24] sm:$0xf]
    %v415 = vld [vmem:[%s404 + $0x28] sm:$0xf]
    %v416 = vld [vmem:[%s404 + $0x2c] sm:$0xf]
    %v417 = vld [vmem:[%s404 + $0x30] sm:$0xf]
    %v418 = vld [vmem:[%s404 + $0x34] sm:$0xf]
    %v419 = vld [vmem:[%s404 + $0x38] sm:$0xf]
    %v420 = vld [vmem:[%s404 + $0x3c] sm:$0xf]
    %v437 = vunpack.c.l.b16 %v405
    %v438 = vunpack.c.l.b16 %v406
    %v439 = vunpack.c.l.b16 %v407
    %v440 = vunpack.c.l.b16 %v408
    %v441 = vunpack.c.l.b16 %v409
    %v442 = vunpack.c.l.b16 %v410
    %v443 = vunpack.c.l.b16 %v411
    %v444 = vunpack.c.l.b16 %v412
    %v445 = vunpack.c.l.b16 %v413
    %v446 = vunpack.c.l.b16 %v414
    %v447 = vunpack.c.l.b16 %v415
    %v448 = vunpack.c.l.b16 %v416
    %v449 = vunpack.c.l.b16 %v417
    %v450 = vunpack.c.l.b16 %v418
    %v451 = vunpack.c.l.b16 %v419
    %v452 = vunpack.c.l.b16 %v420
    %v453 = vpack.c.b16 %v438, %v437
    %v454 = vpack.c.b16 %v440, %v439
    %v455 = vpack.c.b16 %v442, %v441
    %v456 = vpack.c.b16 %v444, %v443
    %v457 = vpack.c.b16 %v446, %v445
    %v458 = vpack.c.b16 %v448, %v447
    %v459 = vpack.c.b16 %v450, %v449
    %v460 = vpack.c.b16 %v452, %v451
    %469 = vmatprep.subr.bf16.mxu0 0
    %470 = vmatpush1.bf16.msra.mxu0 %v453
    %471 = vmatprep.subr.bf16.mxu0 0
    %472 = vmatpush1.bf16.msra.mxu0 %v454
    %473 = vmatprep.subr.bf16.mxu0 0
    %474 = vmatpush1.bf16.msra.mxu0 %v455
    %475 = vmatprep.subr.bf16.mxu0 0
    %476 = vmatpush1.bf16.msra.mxu0 %v456
    %477 = vmatprep.subr.bf16.mxu0 0
    %478 = vmatpush1.bf16.msra.mxu0 %v457
    %479 = vmatprep.subr.bf16.mxu0 0
    %480 = vmatpush1.bf16.msra.mxu0 %v458
    %481 = vmatprep.subr.bf16.mxu0 0
    %482 = vmatpush1.bf16.msra.mxu0 %v459
    %483 = vmatprep.subr.bf16.mxu0 0
    %484 = vmatpush1.bf16.msra.mxu0 %v460
    %485 = vmatprep.subr.bf16.mxu0 0
    %486 = vmatpush1.bf16.msra.mxu0 0
    %487 = vmatprep.subr.bf16.mxu0 0
    %488 = vmatpush1.bf16.msra.mxu0 0
    %489 = vmatprep.subr.bf16.mxu0 0
    %490 = vmatpush1.bf16.msra.mxu0 0
    %491 = vmatprep.subr.bf16.mxu0 0
    %492 = vmatpush1.bf16.msra.mxu0 0
    %493 = vmatprep.subr.bf16.mxu0 0
    %494 = vmatpush1.bf16.msra.mxu0 0
    %495 = vmatprep.subr.bf16.mxu0 0
    %496 = vmatpush1.bf16.msra.mxu0 0
    %497 = vmatprep.subr.bf16.mxu0 0
    %498 = vmatpush1.bf16.msra.mxu0 0
    %499 = vmatprep.subr.bf16.mxu0 0
    %500 = vmatpush1.bf16.msra.mxu0 0
    %501 = vmatprep.mubr.bf16.mxu0 0
    %502 = vmatmul.mubr.bf16.gmra.mrb[0].mxu0 %v344
    %v503 = vpop.f32.mrb[0].mxu0
    %v504 = vadd.f32 0.0, %v503
    %v505 = vpop.f32.mrb[0].mxu0
    %v506 = vpop.f32.mrb[0].mxu0
    %v507 = vadd.f32 0.0, %v506
    %v508 = vpop.f32.mrb[0].mxu0
    %509 = vdwg.mxu0
    %v526 = vunpack.c.l.b16 %v388
    %v527 = vunpack.c.l.b16 %v389
    %v528 = vunpack.c.l.b16 %v390
    %v529 = vunpack.c.l.b16 %v391
    %v530 = vunpack.c.l.b16 %v392
    %v531 = vunpack.c.l.b16 %v393
    %v532 = vunpack.c.l.b16 %v394
    %v533 = vunpack.c.l.b16 %v395
    %v534 = vunpack.c.l.b16 %v396
    %v535 = vunpack.c.l.b16 %v397
    %v536 = vunpack.c.l.b16 %v398
    %v537 = vunpack.c.l.b16 %v399
    %v538 = vunpack.c.l.b16 %v400
    %v539 = vunpack.c.l.b16 %v401
    %v540 = vunpack.c.l.b16 %v402
    %v541 = vunpack.c.l.b16 %v403
    %v542 = vpack.c.b16 %v527, %v526
    %v543 = vpack.c.b16 %v529, %v528
    %v544 = vpack.c.b16 %v531, %v530
    %v545 = vpack.c.b16 %v533, %v532
    %v546 = vpack.c.b16 %v535, %v534
    %v547 = vpack.c.b16 %v537, %v536
    %v548 = vpack.c.b16 %v539, %v538
    %v549 = vpack.c.b16 %v541, %v540
    %558 = vmatprep.subr.bf16.mxu0 0
    %559 = vmatpush1.bf16.msra.mxu0 %v542
    %560 = vmatprep.subr.bf16.mxu0 0
    %561 = vmatpush1.bf16.msra.mxu0 %v543
    %562 = vmatprep.subr.bf16.mxu0 0
    %563 = vmatpush1.bf16.msra.mxu0 %v544
    %564 = vmatprep.subr.bf16.mxu0 0
    %565 = vmatpush1.bf16.msra.mxu0 %v545
    %566 = vmatprep.subr.bf16.mxu0 0
    %567 = vmatpush1.bf16.msra.mxu0 %v546
    %568 = vmatprep.subr.bf16.mxu0 0
    %569 = vmatpush1.bf16.msra.mxu0 %v547
    %570 = vmatprep.subr.bf16.mxu0 0
    %571 = vmatpush1.bf16.msra.mxu0 %v548
    %572 = vmatprep.subr.bf16.mxu0 0
    %573 = vmatpush1.bf16.msra.mxu0 %v549
    %574 = vmatprep.subr.bf16.mxu0 0
    %575 = vmatpush1.bf16.msra.mxu0 0
    %576 = vmatprep.subr.bf16.mxu0 0
    %577 = vmatpush1.bf16.msra.mxu0 0
    %578 = vmatprep.subr.bf16.mxu0 0
    %579 = vmatpush1.bf16.msra.mxu0 0
    %580 = vmatprep.subr.bf16.mxu0 0
    %581 = vmatpush1.bf16.msra.mxu0 0
    %582 = vmatprep.subr.bf16.mxu0 0
    %583 = vmatpush1.bf16.msra.mxu0 0
    %584 = vmatprep.subr.bf16.mxu0 0
    %585 = vmatpush1.bf16.msra.mxu0 0
    %586 = vmatprep.subr.bf16.mxu0 0
    %587 = vmatpush1.bf16.msra.mxu0 0
    %588 = vmatprep.subr.bf16.mxu0 0
    %589 = vmatpush1.bf16.msra.mxu0 0
    %590 = vmatprep.mubr.bf16.mxu0 0
    %591 = vmatmul.mubr.bf16.gmra.mrb[0].mxu0 %v386
    %v592 = vpop.f32.mrb[0].mxu0
    %v593 = vadd.f32 %v504, %v592
    %v594 = vpop.f32.mrb[0].mxu0
    %v595 = vpop.f32.mrb[0].mxu0
    %v596 = vadd.f32 %v507, %v595
    %v597 = vpop.f32.mrb[0].mxu0
    %598 = vdwg.mxu0
    %v599 = vlaneseq
    %v600 = vshrl.u32 %v599, 7
    %v601 = vsub.s32 1, %v600
    %v602 = vrot.slane %v67, %v601
    %v603 = vadd.f32 %v593, %v602
    %v604 = vadd.f32 %v596, %v602
    %v605 = vmax.f32 %v603, 0.0
    %v606 = vmax.f32 %v604, 0.0
    %v607 = vpack.c.bf16 %v606, %v605
    %608 = vmatprep.subr.bf16.mxu0 0
    %609 = vmatpush1.bf16.msra.mxu0 %v607
    %610 = vmatprep.subr.bf16.mxu0 0
    %611 = vmatpush1.bf16.msra.mxu0 0
    %612 = vmatprep.subr.bf16.mxu0 0
    %613 = vmatpush1.bf16.msra.mxu0 0
    %614 = vmatprep.subr.bf16.mxu0 0
    %615 = vmatpush1.bf16.msra.mxu0 0
    %616 = vmatprep.subr.bf16.mxu0 0
    %617 = vmatpush1.bf16.msra.mxu0 0
    %618 = vmatprep.subr.bf16.mxu0 0
    %619 = vmatpush1.bf16.msra.mxu0 0
    %620 = vmatprep.subr.bf16.mxu0 0
    %621 = vmatpush1.bf16.msra.mxu0 0
    %622 = vmatprep.subr.bf16.mxu0 0
    %623 = vmatpush1.bf16.msra.mxu0 0
    %624 = vmatprep.subr.bf16.mxu0 0
    %625 = vmatpush1.bf16.msra.mxu0 0
    %626 = vmatprep.subr.bf16.mxu0 0
    %627 = vmatpush1.bf16.msra.mxu0 0
    %628 = vmatprep.subr.bf16.mxu0 0
    %629 = vmatpush1.bf16.msra.mxu0 0
    %630 = vmatprep.subr.bf16.mxu0 0
    %631 = vmatpush1.bf16.msra.mxu0 0
    %632 = vmatprep.subr.bf16.mxu0 0
    %633 = vmatpush1.bf16.msra.mxu0 0
    %634 = vmatprep.subr.bf16.mxu0 0
    %635 = vmatpush1.bf16.msra.mxu0 0
    %636 = vmatprep.subr.bf16.mxu0 0
    %637 = vmatpush1.bf16.msra.mxu0 0
    %638 = vmatprep.subr.bf16.mxu0 0
    %639 = vmatpush1.bf16.msra.mxu0 0
    %640 = vmatprep.mubr.bf16.mxu0 0
    %641 = vmatmul.mubr.bf16.gmra.mrb[0].mxu0 %v81
    %v642 = vpop.f32.mrb[0].mxu0
    %v643 = vadd.f32 0.0, %v642
    %v644 = vpop.f32.mrb[0].mxu0
    %v645 = vpop.f32.mrb[0].mxu0
    %v646 = vadd.f32 0.0, %v645
    %v647 = vpop.f32.mrb[0].mxu0
    %648 = vdwg.mxu0
    %v649 = vpack.c.bf16 %v646, %v643
    %s650 = scalar_lea.vmem [#allocation7], 256
    %v651 = vld [vmem:[%s650] sm:$0xf]
    %v652 = vld [vmem:[%s650 + $0x4] sm:$0xf]
    %v653 = vld [vmem:[%s650 + $0x8] sm:$0xf]
    %v654 = vld [vmem:[%s650 + $0xc] sm:$0xf]
    %v655 = vld [vmem:[%s650 + $0x10] sm:$0xf]
    %v656 = vld [vmem:[%s650 + $0x14] sm:$0xf]
    %v657 = vld [vmem:[%s650 + $0x18] sm:$0xf]
    %v658 = vld [vmem:[%s650 + $0x1c] sm:$0xf]
    %v659 = vld [vmem:[%s650 + $0x20] sm:$0xf]
    %v660 = vld [vmem:[%s650 + $0x24] sm:$0xf]
    %v661 = vld [vmem:[%s650 + $0x28] sm:$0xf]
    %v662 = vld [vmem:[%s650 + $0x2c] sm:$0xf]
    %v663 = vld [vmem:[%s650 + $0x30] sm:$0xf]
    %v664 = vld [vmem:[%s650 + $0x34] sm:$0xf]
    %v665 = vld [vmem:[%s650 + $0x38] sm:$0xf]
    %v666 = vld [vmem:[%s650 + $0x3c] sm:$0xf]
    %s667 = scalar_lea.vmem [#allocation7], 320
    %v668 = vld [vmem:[%s667] sm:$0xf]
    %v669 = vld [vmem:[%s667 + $0x4] sm:$0xf]
    %v670 = vld [vmem:[%s667 + $0x8] sm:$0xf]
    %v671 = vld [vmem:[%s667 + $0xc] sm:$0xf]
    %v672 = vld [vmem:[%s667 + $0x10] sm:$0xf]
    %v673 = vld [vmem:[%s667 + $0x14] sm:$0xf]
    %v674 = vld [vmem:[%s667 + $0x18] sm:$0xf]
    %v675 = vld [vmem:[%s667 + $0x1c] sm:$0xf]
    %v676 = vld [vmem:[%s667 + $0x20] sm:$0xf]
    %v677 = vld [vmem:[%s667 + $0x24] sm:$0xf]
    %v678 = vld [vmem:[%s667 + $0x28] sm:$0xf]
    %v679 = vld [vmem:[%s667 + $0x2c] sm:$0xf]
    %v680 = vld [vmem:[%s667 + $0x30] sm:$0xf]
    %v681 = vld [vmem:[%s667 + $0x34] sm:$0xf]
    %v682 = vld [vmem:[%s667 + $0x38] sm:$0xf]
    %v683 = vld [vmem:[%s667 + $0x3c] sm:$0xf]
    %v700 = vunpack.c.l.b16 %v668
    %v701 = vunpack.c.l.b16 %v669
    %v702 = vunpack.c.l.b16 %v670
    %v703 = vunpack.c.l.b16 %v671
    %v704 = vunpack.c.l.b16 %v672
    %v705 = vunpack.c.l.b16 %v673
    %v706 = vunpack.c.l.b16 %v674
    %v707 = vunpack.c.l.b16 %v675
    %v708 = vunpack.c.l.b16 %v676
    %v709 = vunpack.c.l.b16 %v677
    %v710 = vunpack.c.l.b16 %v678
    %v711 = vunpack.c.l.b16 %v679
    %v712 = vunpack.c.l.b16 %v680
    %v713 = vunpack.c.l.b16 %v681
    %v714 = vunpack.c.l.b16 %v682
    %v715 = vunpack.c.l.b16 %v683
    %v716 = vpack.c.b16 %v701, %v700
    %v717 = vpack.c.b16 %v703, %v702
    %v718 = vpack.c.b16 %v705, %v704
    %v719 = vpack.c.b16 %v707, %v706
    %v720 = vpack.c.b16 %v709, %v708
    %v721 = vpack.c.b16 %v711, %v710
    %v722 = vpack.c.b16 %v713, %v712
    %v723 = vpack.c.b16 %v715, %v714
    %732 = vmatprep.subr.bf16.mxu0 0
    %733 = vmatpush1.bf16.msra.mxu0 %v716
    %734 = vmatprep.subr.bf16.mxu0 0
    %735 = vmatpush1.bf16.msra.mxu0 %v717
    %736 = vmatprep.subr.bf16.mxu0 0
    %737 = vmatpush1.bf16.msra.mxu0 %v718
    %738 = vmatprep.subr.bf16.mxu0 0
    %739 = vmatpush1.bf16.msra.mxu0 %v719
    %740 = vmatprep.subr.bf16.mxu0 0
    %741 = vmatpush1.bf16.msra.mxu0 %v720
    %742 = vmatprep.subr.bf16.mxu0 0
    %743 = vmatpush1.bf16.msra.mxu0 %v721
    %744 = vmatprep.subr.bf16.mxu0 0
    %745 = vmatpush1.bf16.msra.mxu0 %v722
    %746 = vmatprep.subr.bf16.mxu0 0
    %747 = vmatpush1.bf16.msra.mxu0 %v723
    %748 = vmatprep.subr.bf16.mxu0 0
    %749 = vmatpush1.bf16.msra.mxu0 0
    %750 = vmatprep.subr.bf16.mxu0 0
    %751 = vmatpush1.bf16.msra.mxu0 0
    %752 = vmatprep.subr.bf16.mxu0 0
    %753 = vmatpush1.bf16.msra.mxu0 0
    %754 = vmatprep.subr.bf16.mxu0 0
    %755 = vmatpush1.bf16.msra.mxu0 0
    %756 = vmatprep.subr.bf16.mxu0 0
    %757 = vmatpush1.bf16.msra.mxu0 0
    %758 = vmatprep.subr.bf16.mxu0 0
    %759 = vmatpush1.bf16.msra.mxu0 0
    %760 = vmatprep.subr.bf16.mxu0 0
    %761 = vmatpush1.bf16.msra.mxu0 0
    %762 = vmatprep.subr.bf16.mxu0 0
    %763 = vmatpush1.bf16.msra.mxu0 0
    %764 = vmatprep.mubr.bf16.mxu0 0
    %765 = vmatmul.mubr.bf16.gmra.mrb[0].mxu0 %v607
    %v766 = vpop.f32.mrb[0].mxu0
    %v767 = vadd.f32 0.0, %v766
    %v768 = vpop.f32.mrb[0].mxu0
    %v769 = vpop.f32.mrb[0].mxu0
    %v770 = vadd.f32 0.0, %v769
    %v771 = vpop.f32.mrb[0].mxu0
    %772 = vdwg.mxu0
    %v789 = vunpack.c.l.b16 %v651
    %v790 = vunpack.c.l.b16 %v652
    %v791 = vunpack.c.l.b16 %v653
    %v792 = vunpack.c.l.b16 %v654
    %v793 = vunpack.c.l.b16 %v655
    %v794 = vunpack.c.l.b16 %v656
    %v795 = vunpack.c.l.b16 %v657
    %v796 = vunpack.c.l.b16 %v658
    %v797 = vunpack.c.l.b16 %v659
    %v798 = vunpack.c.l.b16 %v660
    %v799 = vunpack.c.l.b16 %v661
    %v800 = vunpack.c.l.b16 %v662
    %v801 = vunpack.c.l.b16 %v663
    %v802 = vunpack.c.l.b16 %v664
    %v803 = vunpack.c.l.b16 %v665
    %v804 = vunpack.c.l.b16 %v666
    %v805 = vpack.c.b16 %v790, %v789
    %v806 = vpack.c.b16 %v792, %v791
    %v807 = vpack.c.b16 %v794, %v793
    %v808 = vpack.c.b16 %v796, %v795
    %v809 = vpack.c.b16 %v798, %v797
    %v810 = vpack.c.b16 %v800, %v799
    %v811 = vpack.c.b16 %v802, %v801
    %v812 = vpack.c.b16 %v804, %v803
    %821 = vmatprep.subr.bf16.mxu0 0
    %822 = vmatpush1.bf16.msra.mxu0 %v805
    %823 = vmatprep.subr.bf16.mxu0 0
    %824 = vmatpush1.bf16.msra.mxu0 %v806
    %825 = vmatprep.subr.bf16.mxu0 0
    %826 = vmatpush1.bf16.msra.mxu0 %v807
    %827 = vmatprep.subr.bf16.mxu0 0
    %828 = vmatpush1.bf16.msra.mxu0 %v808
    %829 = vmatprep.subr.bf16.mxu0 0
    %830 = vmatpush1.bf16.msra.mxu0 %v809
    %831 = vmatprep.subr.bf16.mxu0 0
    %832 = vmatpush1.bf16.msra.mxu0 %v810
    %833 = vmatprep.subr.bf16.mxu0 0
    %834 = vmatpush1.bf16.msra.mxu0 %v811
    %835 = vmatprep.subr.bf16.mxu0 0
    %836 = vmatpush1.bf16.msra.mxu0 %v812
    %837 = vmatprep.subr.bf16.mxu0 0
    %838 = vmatpush1.bf16.msra.mxu0 0
    %839 = vmatprep.subr.bf16.mxu0 0
    %840 = vmatpush1.bf16.msra.mxu0 0
    %841 = vmatprep.subr.bf16.mxu0 0
    %842 = vmatpush1.bf16.msra.mxu0 0
    %843 = vmatprep.subr.bf16.mxu0 0
    %844 = vmatpush1.bf16.msra.mxu0 0
    %845 = vmatprep.subr.bf16.mxu0 0
    %846 = vmatpush1.bf16.msra.mxu0 0
    %847 = vmatprep.subr.bf16.mxu0 0
    %848 = vmatpush1.bf16.msra.mxu0 0
    %849 = vmatprep.subr.bf16.mxu0 0
    %850 = vmatpush1.bf16.msra.mxu0 0
    %851 = vmatprep.subr.bf16.mxu0 0
    %852 = vmatpush1.bf16.msra.mxu0 0
    %853 = vmatprep.mubr.bf16.mxu0 0
    %854 = vmatmul.mubr.bf16.gmra.mrb[0].mxu0 %v649
    %v855 = vpop.f32.mrb[0].mxu0
    %v856 = vadd.f32 %v767, %v855
    %v857 = vpop.f32.mrb[0].mxu0
    %v858 = vpop.f32.mrb[0].mxu0
    %v859 = vadd.f32 %v770, %v858
    %v860 = vpop.f32.mrb[0].mxu0
    %861 = vdwg.mxu0
    %v862 = vlaneseq
    %v863 = vshrl.u32 %v862, 7
    %v864 = vsub.s32 2, %v863
    %v865 = vrot.slane %v67, %v864
    %v866 = vadd.f32 %v856, %v865
    %v867 = vadd.f32 %v859, %v865
    %v868 = vmax.f32 %v866, 0.0
    %v869 = vmax.f32 %v867, 0.0
    %v870 = vpack.c.bf16 %v869, %v868
    %v871 = vld [vmem:[%s1] sm:$0x1]
    %v873 = vsel %vm79, %v871, 0
    %875 = vmatprep.subr.bf16.mxu0 0
    %876 = vmatpush1.bf16.msra.mxu0 %v870
    %877 = vmatprep.subr.bf16.mxu0 0
    %878 = vmatpush1.bf16.msra.mxu0 0
    %879 = vmatprep.subr.bf16.mxu0 0
    %880 = vmatpush1.bf16.msra.mxu0 0
    %881 = vmatprep.subr.bf16.mxu0 0
    %882 = vmatpush1.bf16.msra.mxu0 0
    %883 = vmatprep.subr.bf16.mxu0 0
    %884 = vmatpush1.bf16.msra.mxu0 0
    %885 = vmatprep.subr.bf16.mxu0 0
    %886 = vmatpush1.bf16.msra.mxu0 0
    %887 = vmatprep.subr.bf16.mxu0 0
    %888 = vmatpush1.bf16.msra.mxu0 0
    %889 = vmatprep.subr.bf16.mxu0 0
    %890 = vmatpush1.bf16.msra.mxu0 0
    %891 = vmatprep.subr.bf16.mxu0 0
    %892 = vmatpush1.bf16.msra.mxu0 0
    %893 = vmatprep.subr.bf16.mxu0 0
    %894 = vmatpush1.bf16.msra.mxu0 0
    %895 = vmatprep.subr.bf16.mxu0 0
    %896 = vmatpush1.bf16.msra.mxu0 0
    %897 = vmatprep.subr.bf16.mxu0 0
    %898 = vmatpush1.bf16.msra.mxu0 0
    %899 = vmatprep.subr.bf16.mxu0 0
    %900 = vmatpush1.bf16.msra.mxu0 0
    %901 = vmatprep.subr.bf16.mxu0 0
    %902 = vmatpush1.bf16.msra.mxu0 0
    %903 = vmatprep.subr.bf16.mxu0 0
    %904 = vmatpush1.bf16.msra.mxu0 0
    %905 = vmatprep.subr.bf16.mxu0 0
    %906 = vmatpush1.bf16.msra.mxu0 0
    %907 = vmatprep.mubr.bf16.mxu0 0
    %908 = vmatmul.mubr.bf16.gmra.mrb[0].mxu0 %v873
    %v909 = vpop.f32.mrb[0].mxu0
    %v910 = vadd.f32 0.0, %v909
    %v911 = vpop.f32.mrb[0].mxu0
    %v912 = vpop.f32.mrb[0].mxu0
    %v913 = vpop.f32.mrb[0].mxu0
    %914 = vdwg.mxu0
    %v915 = vpack.c.bf16 %v910, %v910
    %s916 = scalar_lea.vmem [#allocation7], 384
    %v917 = vld [vmem:[%s916] sm:$0xf]
    %v918 = vld [vmem:[%s916 + $0x4] sm:$0xf]
    %v919 = vld [vmem:[%s916 + $0x8] sm:$0xf]
    %v920 = vld [vmem:[%s916 + $0xc] sm:$0xf]
    %v921 = vld [vmem:[%s916 + $0x10] sm:$0xf]
    %v922 = vld [vmem:[%s916 + $0x14] sm:$0xf]
    %v923 = vld [vmem:[%s916 + $0x18] sm:$0xf]
    %v924 = vld [vmem:[%s916 + $0x1c] sm:$0xf]
    %v925 = vld [vmem:[%s916 + $0x20] sm:$0xf]
    %v926 = vld [vmem:[%s916 + $0x24] sm:$0xf]
    %v927 = vld [vmem:[%s916 + $0x28] sm:$0xf]
    %v928 = vld [vmem:[%s916 + $0x2c] sm:$0xf]
    %v929 = vld [vmem:[%s916 + $0x30] sm:$0xf]
    %v930 = vld [vmem:[%s916 + $0x34] sm:$0xf]
    %v931 = vld [vmem:[%s916 + $0x38] sm:$0xf]
    %v932 = vld [vmem:[%s916 + $0x3c] sm:$0xf]
    %v933 = vlaneseq
    %v934 = vshrl.u32 %v933, 7
    %v935 = vsub.s32 3, %v934
    %v936 = vrot.slane %v67, %v935
    %v953 = vunpack.c.l.b16 %v917
    %v954 = vunpack.c.l.b16 %v918
    %v955 = vunpack.c.l.b16 %v919
    %v956 = vunpack.c.l.b16 %v920
    %v957 = vunpack.c.l.b16 %v921
    %v958 = vunpack.c.l.b16 %v922
    %v959 = vunpack.c.l.b16 %v923
    %v960 = vunpack.c.l.b16 %v924
    %v961 = vunpack.c.l.b16 %v925
    %v962 = vunpack.c.l.b16 %v926
    %v963 = vunpack.c.l.b16 %v927
    %v964 = vunpack.c.l.b16 %v928
    %v965 = vunpack.c.l.b16 %v929
    %v966 = vunpack.c.l.b16 %v930
    %v967 = vunpack.c.l.b16 %v931
    %v968 = vunpack.c.l.b16 %v932
    %v969 = vpack.c.b16 %v954, %v953
    %v970 = vpack.c.b16 %v956, %v955
    %v971 = vpack.c.b16 %v958, %v957
    %v972 = vpack.c.b16 %v960, %v959
    %v973 = vpack.c.b16 %v962, %v961
    %v974 = vpack.c.b16 %v964, %v963
    %v975 = vpack.c.b16 %v966, %v965
    %v976 = vpack.c.b16 %v968, %v967
    %985 = vmatprep.subr.bf16.mxu0 0
    %986 = vmatpush1.bf16.msra.mxu0 %v969
    %987 = vmatprep.subr.bf16.mxu0 0
    %988 = vmatpush1.bf16.msra.mxu0 %v970
    %989 = vmatprep.subr.bf16.mxu0 0
    %990 = vmatpush1.bf16.msra.mxu0 %v971
    %991 = vmatprep.subr.bf16.mxu0 0
    %992 = vmatpush1.bf16.msra.mxu0 %v972
    %993 = vmatprep.subr.bf16.mxu0 0
    %994 = vmatpush1.bf16.msra.mxu0 %v973
    %995 = vmatprep.subr.bf16.mxu0 0
    %996 = vmatpush1.bf16.msra.mxu0 %v974
    %997 = vmatprep.subr.bf16.mxu0 0
    %998 = vmatpush1.bf16.msra.mxu0 %v975
    %999 = vmatprep.subr.bf16.mxu0 0
    %1000 = vmatpush1.bf16.msra.mxu0 %v976
    %1001 = vmatprep.subr.bf16.mxu0 0
    %1002 = vmatpush1.bf16.msra.mxu0 0
    %1003 = vmatprep.subr.bf16.mxu0 0
    %1004 = vmatpush1.bf16.msra.mxu0 0
    %1005 = vmatprep.subr.bf16.mxu0 0
    %1006 = vmatpush1.bf16.msra.mxu0 0
    %1007 = vmatprep.subr.bf16.mxu0 0
    %1008 = vmatpush1.bf16.msra.mxu0 0
    %1009 = vmatprep.subr.bf16.mxu0 0
    %1010 = vmatpush1.bf16.msra.mxu0 0
    %1011 = vmatprep.subr.bf16.mxu0 0
    %1012 = vmatpush1.bf16.msra.mxu0 0
    %1013 = vmatprep.subr.bf16.mxu0 0
    %1014 = vmatpush1.bf16.msra.mxu0 0
    %1015 = vmatprep.subr.bf16.mxu0 0
    %1016 = vmatpush1.bf16.msra.mxu0 0
    %1017 = vmatprep.mubr.bf16.mxu0 0
    %1018 = vmatmul.mubr.bf16.gmra.mrb[0].mxu0 %v915
    %v1019 = vpop.f32.mrb[0].mxu0
    %v1020 = vadd.f32 %v936, %v1019
    %v1021 = vpop.f32.mrb[0].mxu0
    %v1022 = vpop.f32.mrb[0].mxu0
    %v1023 = vpop.f32.mrb[0].mxu0
    %1024 = vdwg.mxu0
    %v1025 = vmax.f32 %v1020, 0.0
    %v1026 = vpack.c.bf16 %v1025, %v1025
    %s1027 = scalar_lea.vmem [#allocation7], 448
    %v1028 = vld [vmem:[%s1027] sm:$0xf]
    %v1029 = vld [vmem:[%s1027 + $0x4] sm:$0xf]
    %v1030 = vld [vmem:[%s1027 + $0x8] sm:$0xf]
    %v1031 = vld [vmem:[%s1027 + $0xc] sm:$0xf]
    %v1032 = vld [vmem:[%s1027 + $0x10] sm:$0xf]
    %v1033 = vld [vmem:[%s1027 + $0x14] sm:$0xf]
    %v1034 = vld [vmem:[%s1027 + $0x18] sm:$0xf]
    %v1035 = vld [vmem:[%s1027 + $0x1c] sm:$0xf]
    %v1036 = vld [vmem:[%s1027 + $0x20] sm:$0xf]
    %v1037 = vld [vmem:[%s1027 + $0x24] sm:$0xf]
    %v1038 = vld [vmem:[%s1027 + $0x28] sm:$0xf]
    %v1039 = vld [vmem:[%s1027 + $0x2c] sm:$0xf]
    %v1040 = vld [vmem:[%s1027 + $0x30] sm:$0xf]
    %v1041 = vld [vmem:[%s1027 + $0x34] sm:$0xf]
    %v1042 = vld [vmem:[%s1027 + $0x38] sm:$0xf]
    %v1043 = vld [vmem:[%s1027 + $0x3c] sm:$0xf]
    %v1044 = vlaneseq
    %v1045 = vshrl.u32 %v1044, 7
    %v1046 = vsub.s32 4, %v1045
    %v1047 = vrot.slane %v67, %v1046
    %v1064 = vunpack.c.l.b16 %v1028
    %v1065 = vunpack.c.l.b16 %v1029
    %v1066 = vunpack.c.l.b16 %v1030
    %v1067 = vunpack.c.l.b16 %v1031
    %v1068 = vunpack.c.l.b16 %v1032
    %v1069 = vunpack.c.l.b16 %v1033
    %v1070 = vunpack.c.l.b16 %v1034
    %v1071 = vunpack.c.l.b16 %v1035
    %v1072 = vunpack.c.l.b16 %v1036
    %v1073 = vunpack.c.l.b16 %v1037
    %v1074 = vunpack.c.l.b16 %v1038
    %v1075 = vunpack.c.l.b16 %v1039
    %v1076 = vunpack.c.l.b16 %v1040
    %v1077 = vunpack.c.l.b16 %v1041
    %v1078 = vunpack.c.l.b16 %v1042
    %v1079 = vunpack.c.l.b16 %v1043
    %v1080 = vpack.c.b16 %v1065, %v1064
    %v1081 = vpack.c.b16 %v1067, %v1066
    %v1082 = vpack.c.b16 %v1069, %v1068
    %v1083 = vpack.c.b16 %v1071, %v1070
    %v1084 = vpack.c.b16 %v1073, %v1072
    %v1085 = vpack.c.b16 %v1075, %v1074
    %v1086 = vpack.c.b16 %v1077, %v1076
    %v1087 = vpack.c.b16 %v1079, %v1078
    %1096 = vmatprep.subr.bf16.mxu0 0
    %1097 = vmatpush1.bf16.msra.mxu0 %v1080
    %1098 = vmatprep.subr.bf16.mxu0 0
    %1099 = vmatpush1.bf16.msra.mxu0 %v1081
    %1100 = vmatprep.subr.bf16.mxu0 0
    %1101 = vmatpush1.bf16.msra.mxu0 %v1082
    %1102 = vmatprep.subr.bf16.mxu0 0
    %1103 = vmatpush1.bf16.msra.mxu0 %v1083
    %1104 = vmatprep.subr.bf16.mxu0 0
    %1105 = vmatpush1.bf16.msra.mxu0 %v1084
    %1106 = vmatprep.subr.bf16.mxu0 0
    %1107 = vmatpush1.bf16.msra.mxu0 %v1085
    %1108 = vmatprep.subr.bf16.mxu0 0
    %1109 = vmatpush1.bf16.msra.mxu0 %v1086
    %1110 = vmatprep.subr.bf16.mxu0 0
    %1111 = vmatpush1.bf16.msra.mxu0 %v1087
    %1112 = vmatprep.subr.bf16.mxu0 0
    %1113 = vmatpush1.bf16.msra.mxu0 0
    %1114 = vmatprep.subr.bf16.mxu0 0
    %1115 = vmatpush1.bf16.msra.mxu0 0
    %1116 = vmatprep.subr.bf16.mxu0 0
    %1117 = vmatpush1.bf16.msra.mxu0 0
    %1118 = vmatprep.subr.bf16.mxu0 0
    %1119 = vmatpush1.bf16.msra.mxu0 0
    %1120 = vmatprep.subr.bf16.mxu0 0
    %1121 = vmatpush1.bf16.msra.mxu0 0
    %1122 = vmatprep.subr.bf16.mxu0 0
    %1123 = vmatpush1.bf16.msra.mxu0 0
    %1124 = vmatprep.subr.bf16.mxu0 0
    %1125 = vmatpush1.bf16.msra.mxu0 0
    %1126 = vmatprep.subr.bf16.mxu0 0
    %1127 = vmatpush1.bf16.msra.mxu0 0
    %1128 = vmatprep.mubr.bf16.mxu0 0
    %1129 = vmatmul.mubr.bf16.gmra.mrb[0].mxu0 %v1026
    %v1130 = vpop.f32.mrb[0].mxu0
    %v1131 = vadd.f32 %v1047, %v1130
    %v1132 = vpop.f32.mrb[0].mxu0
    %v1133 = vpop.f32.mrb[0].mxu0
    %v1134 = vpop.f32.mrb[0].mxu0
    %1135 = vdwg.mxu0
    %1136 = vst [vmem:[#allocation8] sm:$0x3] %v1131
    // Predicated region
    $region34: #{tpu_custom_call.1} parent=1 // pred_check
      _
    $region35: #{tpu_custom_call.1} parent=1 // pred_check_branch
      %1138 = sbr.rel (0) target = $region37
    $region36: #{tpu_custom_call.1} parent=1 // pred_region
      %s1140 = ssub.s32 32, 32
      %1141 = vsyncadd [#allocation4], %s1140
      %s1143 = sshll.u32 [#allocation8], 4
      %s1144 = int_to_ptr.vmem [resolvable:$true] %s1143
      %1146 = dma.vmem_to_hbm [thread:$0]  %s1144, 32, %s5, [#allocation4]
    $region37: #{tpu_custom_call.1} parent=1 // pred_fallthru
      _
    // Predicated region
    $region38: #{tpu_custom_call.1} parent=1 // pred_check
      _
    $region39: #{tpu_custom_call.1} parent=1 // pred_check_branch
      %1148 = sbr.rel (0) target = $region41
    $region40: #{tpu_custom_call.1} parent=1 // pred_region
      %1149 = dma.done [#allocation4], 32
    $region41: #{tpu_custom_call.1} parent=1 // pred_fallthru
      _
    %1150 = vsyncpa [#allocation3], 1
    %1151 = vsyncpa [#allocation6], 1
    %1152 = vsyncpa [#allocation4], 1

</llo_original>
